<compile_context>
chip_gen: v7x
topology: tpu7x:2x2x1
jax: 0.10.0
libtpu: 0.0.40
codegen_flags: <defaults>
</compile_context>

<pallas_src>
import functools

import jax
import jax.numpy as jnp
import numpy as np
from jax.experimental import pallas as pl
from jax.experimental.pallas import tpu as pltpu


def _round_up(n, m):
    return ((n + m - 1) // m) * m


def _cdiv(a, b):
    return (a + b - 1) // b


def _has_megacore():
    """True only on chips with 2 TensorCores per device (v4/v5p megacore, v7x).

    Splitting a "parallel" grid axis only pays off there; on v5e/v6e it just
    adds ~0.35us/step overhead and shrinks MXU fill for zero gain."""
    try:
        kind = (getattr(jax.devices()[0], "device_kind", "") or "").lower()
    except Exception:
        return False
    return any(tag in kind for tag in ("v7", "tpu7", "7x", "v5p", "v4"))


def _mlp_kernel(x_ref, w1_ref, b1_ref, w2_ref, b2_ref, w3_ref, b3_ref, o_ref):
    # x arrives as f32 straight from HBM; cast to bf16 in-kernel (VPU) so the
    # wrapper does not need a separate HBM round-trip just for the cast.
    x = x_ref[...].astype(jnp.bfloat16)                                # (TB, D)
    h1 = jnp.dot(x, w1_ref[...], preferred_element_type=jnp.float32) + b1_ref[...]
    h1 = jnp.maximum(h1, 0.0).astype(jnp.bfloat16)                     # (TB, H1p)
    h2 = jnp.dot(h1, w2_ref[...], preferred_element_type=jnp.float32) + b2_ref[...]
    h2 = jnp.maximum(h2, 0.0).astype(jnp.bfloat16)                     # (TB, H2p)
    out = jnp.dot(h2, w3_ref[...], preferred_element_type=jnp.float32) + b3_ref[...]
    o_ref[...] = out.astype(o_ref.dtype)                               # (TB, NCp) f32


@functools.partial(
    jax.jit, static_argnames=("num_classes", "block_b_max", "megacore"))
def _forward_impl(x, params, *, num_classes, block_b_max, megacore):
    b = x.shape[0]
    x2d = x.reshape(b, -1)                     # stays f32; cast happens in-kernel
    d = x2d.shape[1]

    w1, b1, w2, b2, w3, b3 = params
    h1p, h2p, ncp = w1.shape[1], w2.shape[1], w3.shape[1]

    # --- batch tiling ---------------------------------------------------
    # VMEM-aware cap: keep a double-buffered f32 x tile around <= ~8 MiB total.
    vmem_rows = max(16, ((4 << 20) // (d * 4)) // 16 * 16)
    bb_max = max(16, min(block_b_max, vmem_rows))

    bp16 = _round_up(b, 16)                    # 16-row multiple (bf16 packing)
    n_steps = _cdiv(bp16, bb_max)
    if megacore and n_steps == 1 and bp16 >= 32:
        n_steps = 2                            # let the 2 TCs split the grid
    block_b = _round_up(_cdiv(bp16, n_steps), 16)
    bp = block_b * n_steps
    if bp != b:
        x2d = jnp.pad(x2d, ((0, bp - b), (0, 0)))
    grid = (n_steps,)

    flops = 2 * bp * (d * h1p + h1p * h2p + h2p * ncp)
    bytes_accessed = (
        bp * d * 4                                   # x (f32, read once)
        + (d * h1p + h1p * h2p + h2p * ncp) * 2      # weights (bf16)
        + (h1p + h2p + ncp) * 4                      # biases (f32)
        + bp * ncp * 4                               # output (f32)
    )

    out = pl.pallas_call(
        _mlp_kernel,
        out_shape=jax.ShapeDtypeStruct((bp, ncp), jnp.float32),
        grid_spec=pltpu.PrefetchScalarGridSpec(
            num_scalar_prefetch=0,
            grid=grid,
            in_specs=[
                pl.BlockSpec((block_b, d), lambda i: (i, 0)),   # x tile (f32)
                # Constant index_maps: weights/biases are DMA'd once and stay
                # VMEM-resident across all grid steps.
                pl.BlockSpec((d, h1p), lambda i: (0, 0)),       # w1
                pl.BlockSpec((1, h1p), lambda i: (0, 0)),       # b1
                pl.BlockSpec((h1p, h2p), lambda i: (0, 0)),     # w2
                pl.BlockSpec((1, h2p), lambda i: (0, 0)),       # b2
                pl.BlockSpec((h2p, ncp), lambda i: (0, 0)),     # w3
                pl.BlockSpec((1, ncp), lambda i: (0, 0)),       # b3
            ],
            out_specs=pl.BlockSpec((block_b, ncp), lambda i: (i, 0)),
        ),
        compiler_params=pltpu.CompilerParams(
            dimension_semantics=("parallel",),
        ),
        cost_estimate=pl.CostEstimate(
            flops=flops, transcendentals=0, bytes_accessed=bytes_accessed),
    )(x2d, w1, b1, w2, b2, w3, b3)

    # Strip batch padding and the lane padding on the class dimension.
    return out[:b, :num_classes]


def linear_model_forward(x, params, *, num_classes, block_b_max=512):
    """x: (B, C, H, W) or (B, D) float32. Returns (B, num_classes) float32."""
    return _forward_impl(x, params, num_classes=num_classes,
                         block_b_max=block_b_max, megacore=_has_megacore())


def init_params(key, in_node, num_classes, h1=200, h2=200):
    """Deterministic init matching the PyTorch module (xavier_normal_ weights,
    zero biases). Weights are stored pre-transposed as (in, out), zero-padded
    on the out dims to 128-lane multiples (200 -> 256, num_classes -> 128) and
    cast to bf16 (MXU-native). Zero padding contributes nothing to the result."""
    k1, k2, k3 = jax.random.split(key, 3)

    h1p = _round_up(h1, 128)
    h2p = _round_up(h2, 128)
    ncp = _round_up(num_classes, 128)

    def xavier_normal(k, fan_in, fan_out):
        std = np.sqrt(2.0 / (fan_in + fan_out))
        # PyTorch weight is (out, in); we generate (in, out) directly — xavier
        # std is symmetric in fan_in/fan_out so the distribution matches.
        return jax.random.normal(k, (fan_in, fan_out), jnp.float32) * std

    def pad_to(a, shape):
        return jnp.pad(a, [(0, s - n) for n, s in zip(a.shape, shape)])

    w1 = pad_to(xavier_normal(k1, in_node, h1), (in_node, h1p)).astype(jnp.bfloat16)
    b1 = jnp.zeros((1, h1p), jnp.float32)
    w2 = pad_to(xavier_normal(k2, h1, h2), (h1p, h2p)).astype(jnp.bfloat16)
    b2 = jnp.zeros((1, h2p), jnp.float32)
    w3 = pad_to(xavier_normal(k3, h2, num_classes), (h2p, ncp)).astype(jnp.bfloat16)
    b3 = jnp.zeros((1, ncp), jnp.float32)
    return (w1, b1, w2, b2, w3, b3)


def reference_forward_bf16(x, params, num_classes):
    """Pure-JAX reference on the same bf16-cast / f32-accumulate path."""
    w1, b1, w2, b2, w3, b3 = params
    x2d = x.reshape(x.shape[0], -1).astype(jnp.bfloat16)
    h = jnp.maximum(jnp.dot(x2d, w1, preferred_element_type=jnp.float32) + b1, 0.0)
    h = jnp.maximum(jnp.dot(h.astype(jnp.bfloat16), w2,
                            preferred_element_type=jnp.float32) + b2, 0.0)
    out = jnp.dot(h.astype(jnp.bfloat16), w3,
                  preferred_element_type=jnp.float32) + b3
    return out[:, :num_classes]


def reference_forward_f32(x, params, num_classes):
    """Full-f32 reference of the original PyTorch semantics (loose sanity check)."""
    w1, b1, w2, b2, w3, b3 = params
    x2d = x.reshape(x.shape[0], -1).astype(jnp.float32)
    h = jnp.maximum(x2d @ w1.astype(jnp.float32) + b1, 0.0)
    h = jnp.maximum(h @ w2.astype(jnp.float32) + b2, 0.0)
    out = h @ w3.astype(jnp.float32) + b3
    return out[:, :num_classes]


if __name__ == "__main__":
    # Small shapes consistent with the module: batch=2, 3x16x16 images,
    # in_node = 3*16*16 = 768, num_classes = 10.
    key = jax.random.PRNGKey(0)
    kx, kp = jax.random.split(key)

    batch, c, hgt, wid = 2, 3, 16, 16
    in_node = c * hgt * wid
    num_classes = 10

    x = jax.random.normal(kx, (batch, c, hgt, wid), jnp.float32)
    params = init_params(kp, in_node, num_classes)

    out = linear_model_forward(x, params, num_classes=num_classes)
    out = jax.block_until_ready(out)
    assert out.shape == (batch, num_classes)

    # Tight check against a reference on the identical bf16/f32-acc path.
    ref_bf16 = reference_forward_bf16(x, params, num_classes)
    np.testing.assert_allclose(np.asarray(out), np.asarray(ref_bf16),
                               rtol=1e-3, atol=1e-3)

    # Loose check against the full-f32 PyTorch-semantics reference
    # (bf16 matmul inputs shift results beyond f32 tolerance; bounds the drift).
    ref_f32 = reference_forward_f32(x, params, num_classes)
    np.testing.assert_allclose(np.asarray(out), np.asarray(ref_f32),
                               rtol=1e-1, atol=1e-1)

    print("KERNEL_OK")
</pallas_src>

<mosaic_0001>
module attributes {stable_mosaic.version = 11 : i64} {
  func.func @_mlp_kernel(%arg0: i32, %arg1: memref<16x768xf32, #tpu.memory_space<vmem>>, %arg2: memref<768x256xbf16, #tpu.memory_space<vmem>>, %arg3: memref<1x256xf32, #tpu.memory_space<vmem>>, %arg4: memref<256x256xbf16, #tpu.memory_space<vmem>>, %arg5: memref<1x256xf32, #tpu.memory_space<vmem>>, %arg6: memref<256x128xbf16, #tpu.memory_space<vmem>>, %arg7: memref<1x128xf32, #tpu.memory_space<vmem>>, %arg8: memref<16x128xf32, #tpu.memory_space<vmem>>) attributes {dimension_semantics = [#tpu.dimension_semantics<parallel>], iteration_bounds = array<i64: 1>, scalar_prefetch = 0 : i64, scratch_operands = 0 : i64, tpu.core_type = #tpu.core_type<tc>, window_params = [{transform_indices = @transform_0, window_bounds = array<i64: 16, 768>}, {pipeline_mode = #tpu.pipeline_mode<synchronous>, transform_indices = @transform_1, window_bounds = array<i64: 768, 256>}, {pipeline_mode = #tpu.pipeline_mode<synchronous>, transform_indices = @transform_2, window_bounds = array<i64: 1, 256>}, {pipeline_mode = #tpu.pipeline_mode<synchronous>, transform_indices = @transform_3, window_bounds = array<i64: 256, 256>}, {pipeline_mode = #tpu.pipeline_mode<synchronous>, transform_indices = @transform_4, window_bounds = array<i64: 1, 256>}, {pipeline_mode = #tpu.pipeline_mode<synchronous>, transform_indices = @transform_5, window_bounds = array<i64: 256, 128>}, {pipeline_mode = #tpu.pipeline_mode<synchronous>, transform_indices = @transform_6, window_bounds = array<i64: 1, 128>}, {transform_indices = @transform_7, window_bounds = array<i64: 16, 128>}]} {
    %c0 = arith.constant 0 : index
    %c0_0 = arith.constant 0 : index
    %0 = vector.load %arg1[%c0, %c0_0] : memref<16x768xf32, #tpu.memory_space<vmem>>, vector<16x768xf32>
    %1 = arith.truncf %0 : vector<16x768xf32> to vector<16x768xbf16>
    %c0_1 = arith.constant 0 : index
    %c0_2 = arith.constant 0 : index
    %2 = vector.load %arg2[%c0_1, %c0_2] : memref<768x256xbf16, #tpu.memory_space<vmem>>, vector<768x256xbf16>
    %cst = arith.constant dense<0.000000e+00> : vector<16x256xf32>
    %3 = tpu.matmul %1, %2, %cst {dimension_numbers = #tpu.dot_dimension_numbers<[1], [0], [0], [1], [0, 0, 1, 1], [], []>} : vector<16x768xbf16>, vector<768x256xbf16>, vector<16x256xf32> -> vector<16x256xf32>
    %c0_3 = arith.constant 0 : index
    %c0_4 = arith.constant 0 : index
    %4 = vector.load %arg3[%c0_3, %c0_4] : memref<1x256xf32, #tpu.memory_space<vmem>>, vector<1x256xf32>
    %5 = vector.broadcast %4 : vector<1x256xf32> to vector<16x256xf32>
    %6 = arith.addf %3, %5 : vector<16x256xf32>
    %cst_5 = arith.constant 0.000000e+00 : f32
    %7 = vector.broadcast %cst_5 : f32 to vector<16x256xf32>
    %8 = arith.maximumf %6, %7 : vector<16x256xf32>
    %9 = arith.truncf %8 : vector<16x256xf32> to vector<16x256xbf16>
    %c0_6 = arith.constant 0 : index
    %c0_7 = arith.constant 0 : index
    %10 = vector.load %arg4[%c0_6, %c0_7] : memref<256x256xbf16, #tpu.memory_space<vmem>>, vector<256x256xbf16>
    %cst_8 = arith.constant dense<0.000000e+00> : vector<16x256xf32>
    %11 = tpu.matmul %9, %10, %cst_8 {dimension_numbers = #tpu.dot_dimension_numbers<[1], [0], [0], [1], [0, 0, 1, 1], [], []>} : vector<16x256xbf16>, vector<256x256xbf16>, vector<16x256xf32> -> vector<16x256xf32>
    %c0_9 = arith.constant 0 : index
    %c0_10 = arith.constant 0 : index
    %12 = vector.load %arg5[%c0_9, %c0_10] : memref<1x256xf32, #tpu.memory_space<vmem>>, vector<1x256xf32>
    %13 = vector.broadcast %12 : vector<1x256xf32> to vector<16x256xf32>
    %14 = arith.addf %11, %13 : vector<16x256xf32>
    %cst_11 = arith.constant 0.000000e+00 : f32
    %15 = vector.broadcast %cst_11 : f32 to vector<16x256xf32>
    %16 = arith.maximumf %14, %15 : vector<16x256xf32>
    %17 = arith.truncf %16 : vector<16x256xf32> to vector<16x256xbf16>
    %c0_12 = arith.constant 0 : index
    %c0_13 = arith.constant 0 : index
    %18 = vector.load %arg6[%c0_12, %c0_13] : memref<256x128xbf16, #tpu.memory_space<vmem>>, vector<256x128xbf16>
    %cst_14 = arith.constant dense<0.000000e+00> : vector<16x128xf32>
    %19 = tpu.matmul %17, %18, %cst_14 {dimension_numbers = #tpu.dot_dimension_numbers<[1], [0], [0], [1], [0, 0, 1, 1], [], []>} : vector<16x256xbf16>, vector<256x128xbf16>, vector<16x128xf32> -> vector<16x128xf32>
    %c0_15 = arith.constant 0 : index
    %c0_16 = arith.constant 0 : index
    %20 = vector.load %arg7[%c0_15, %c0_16] : memref<1x128xf32, #tpu.memory_space<vmem>>, vector<1x128xf32>
    %21 = vector.broadcast %20 : vector<1x128xf32> to vector<16x128xf32>
    %22 = arith.addf %19, %21 : vector<16x128xf32>
    %c0_17 = arith.constant 0 : index
    %c0_18 = arith.constant 0 : index
    %23 = vector.load %arg8[%c0_17, %c0_18] : memref<16x128xf32, #tpu.memory_space<vmem>>, vector<16x128xf32>
    tpu.vector_store %arg8[%c0_17, %c0_18], %22 {strides = array<i32>} : memref<16x128xf32, #tpu.memory_space<vmem>>, vector<16x128xf32>,
    return
  }
  func.func @transform_0(%arg0: i32) -> (i32, i32) {
    %c0_i32 = arith.constant 0 : i32
    %c0_i32_0 = arith.constant 0 : i32
    return %arg0, %c0_i32 : i32, i32
  }
  func.func @transform_1(%arg0: i32) -> (i32, i32) {
    %c0_i32 = arith.constant 0 : i32
    %c0_i32_0 = arith.constant 0 : i32
    %c0_i32_1 = arith.constant 0 : i32
    return %c0_i32, %c0_i32_0 : i32, i32
  }
  func.func @transform_2(%arg0: i32) -> (i32, i32) {
    %c0_i32 = arith.constant 0 : i32
    %c0_i32_0 = arith.constant 0 : i32
    %c0_i32_1 = arith.constant 0 : i32
    return %c0_i32, %c0_i32_0 : i32, i32
  }
  func.func @transform_3(%arg0: i32) -> (i32, i32) {
    %c0_i32 = arith.constant 0 : i32
    %c0_i32_0 = arith.constant 0 : i32
    %c0_i32_1 = arith.constant 0 : i32
    return %c0_i32, %c0_i32_0 : i32, i32
  }
  func.func @transform_4(%arg0: i32) -> (i32, i32) {
    %c0_i32 = arith.constant 0 : i32
    %c0_i32_0 = arith.constant 0 : i32
    %c0_i32_1 = arith.constant 0 : i32
    return %c0_i32, %c0_i32_0 : i32, i32
  }
  func.func @transform_5(%arg0: i32) -> (i32, i32) {
    %c0_i32 = arith.constant 0 : i32
    %c0_i32_0 = arith.constant 0 : i32
    %c0_i32_1 = arith.constant 0 : i32
    return %c0_i32, %c0_i32_0 : i32, i32
  }
  func.func @transform_6(%arg0: i32) -> (i32, i32) {
    %c0_i32 = arith.constant 0 : i32
    %c0_i32_0 = arith.constant 0 : i32
    %c0_i32_1 = arith.constant 0 : i32
    return %c0_i32, %c0_i32_0 : i32, i32
  }
  func.func @transform_7(%arg0: i32) -> (i32, i32) {
    %c0_i32 = arith.constant 0 : i32
    %c0_i32_0 = arith.constant 0 : i32
    return %arg0, %c0_i32 : i32, i32
  }
}

</mosaic_0001>

<llo_original>
// kernel: _forward_impl.1
$region0: #{_forward_impl.1}
  #allocation0 [shape = 'u32[]', space=smem, size = 0x4, offset = 0x4, fixed_abs, tag = 'smem constant byte address 0x4 - core index']
  #allocation1 [shape = 'u32[144,128]{1,0:T(1,128)}', space=vmem, size = 0x12000, scoped, tag = 'internal scratch']
  %s0 = inlined_call_operand.vmem [shape: f32[16,768], index: 0, kind: input, shape index: {}]
  %s1 = inlined_call_operand.hbm [shape: bf16[768,256], index: 1, kind: input, shape index: {}]
  %s2 = inlined_call_operand.vmem [shape: f32[1,256], index: 2, kind: input, shape index: {}]
  %s3 = inlined_call_operand.hbm [shape: bf16[256,256], index: 3, kind: input, shape index: {}]
  %s4 = inlined_call_operand.vmem [shape: f32[1,256], index: 4, kind: input, shape index: {}]
  %s5 = inlined_call_operand.vmem [shape: bf16[256,128], index: 5, kind: input, shape index: {}]
  %s6 = inlined_call_operand.vmem [shape: f32[1,128], index: 6, kind: input, shape index: {}]
  %s7 = inlined_call_operand.vmem [shape: f32[16,128], index: 7, kind: output, shape index: {}]
  %s8 = sld [smem:[#allocation0]]
  $region46: #{_forward_impl.1} parent=0
    _
  %s10 = ssub.s32 1, %s8
  %s11 = scalar_select 0, %s10, %s8
  $region1: #{_forward_impl.1} parent=0
    #allocation2 [shape = 'u8[393216]{0}', space=vmem, size = 0x60000, scoped, tag = 'input window, operand 1, single buffered']
    #allocation3 [shape = 's32[1]{0}', space=sflag, size = 0x4, scoped, tag = 'scoped memory for _forward_impl.1']
    #allocation4 [shape = 'u8[131072]{0}', space=vmem, size = 0x20000, scoped, tag = 'input window, operand 3, single buffered']
    #allocation5 [shape = 's32[1]{0}', space=sflag, size = 0x4, scoped, tag = 'scoped memory for _forward_impl.1']
    %12 = vsyncpa [#allocation3], 0
    %13 = vsyncpa [#allocation5], 0
    // Predicated region
    $region2: #{_forward_impl.1} parent=1 // pred_check
      _
    $region3: #{_forward_impl.1} parent=1 // pred_check_branch
      %15 = sbr.rel (0) target = $region5
    $region4: #{_forward_impl.1} parent=1 // pred_region
      _
    $region5: #{_forward_impl.1} parent=1 // pred_fallthru
      _
    // Predicated region
    $region6: #{_forward_impl.1} parent=1 // pred_check
      _
    $region7: #{_forward_impl.1} parent=1 // pred_check_branch
      %17 = sbr.rel (0) target = $region9
    $region8: #{_forward_impl.1} parent=1 // pred_region
      %s19 = ssub.s32 12288, 12288
      %20 = vsyncadd [#allocation3], %s19
      %s21 = sshll.u32 [#allocation2], 4
      %s22 = int_to_ptr.vmem [resolvable:$true] %s21
      %27 = dma.hbm_to_vmem [thread:$0]  %s1, 12288, %s22, [#allocation3], 128, 128, 8
    $region9: #{_forward_impl.1} parent=1 // pred_fallthru
      _
    // Predicated region
    $region10: #{_forward_impl.1} parent=1 // pred_check
      _
    $region11: #{_forward_impl.1} parent=1 // pred_check_branch
      %29 = sbr.rel (0) target = $region13
    $region12: #{_forward_impl.1} parent=1 // pred_region
      _
    $region13: #{_forward_impl.1} parent=1 // pred_fallthru
      _
    // Predicated region
    $region14: #{_forward_impl.1} parent=1 // pred_check
      _
    $region15: #{_forward_impl.1} parent=1 // pred_check_branch
      %31 = sbr.rel (0) target = $region17
    $region16: #{_forward_impl.1} parent=1 // pred_region
      %s33 = ssub.s32 4096, 4096
      %34 = vsyncadd [#allocation5], %s33
      %s35 = sshll.u32 [#allocation4], 4
      %s36 = int_to_ptr.vmem [resolvable:$true] %s35
      %41 = dma.hbm_to_vmem [thread:$0]  %s3, 4096, %s36, [#allocation5], 128, 128, 8
    $region17: #{_forward_impl.1} parent=1 // pred_fallthru
      _
    // Predicated region
    $region18: #{_forward_impl.1} parent=1 // pred_check
      _
    $region19: #{_forward_impl.1} parent=1 // pred_check_branch
      %43 = sbr.rel (0) target = $region21
    $region20: #{_forward_impl.1} parent=1 // pred_region
      _
    $region21: #{_forward_impl.1} parent=1 // pred_fallthru
      _
    // Predicated region
    $region22: #{_forward_impl.1} parent=1 // pred_check
      _
    $region23: #{_forward_impl.1} parent=1 // pred_check_branch
      %45 = sbr.rel (0) target = $region25
    $region24: #{_forward_impl.1} parent=1 // pred_region
      _
    $region25: #{_forward_impl.1} parent=1 // pred_fallthru
      _
    // Predicated region
    $region26: #{_forward_impl.1} parent=1 // pred_check
      _
    $region27: #{_forward_impl.1} parent=1 // pred_check_branch
      %47 = sbr.rel (0) target = $region29
    $region28: #{_forward_impl.1} parent=1 // pred_region
      _
    $region29: #{_forward_impl.1} parent=1 // pred_fallthru
      _
    // Predicated region
    $region30: #{_forward_impl.1} parent=1 // pred_check
      _
    $region31: #{_forward_impl.1} parent=1 // pred_check_branch
      %49 = sbr.rel (0) target = $region33
    $region32: #{_forward_impl.1} parent=1 // pred_region
      %50 = dma.done [#allocation3], 12288
    $region33: #{_forward_impl.1} parent=1 // pred_fallthru
      _
    // Predicated region
    $region34: #{_forward_impl.1} parent=1 // pred_check
      _
    $region35: #{_forward_impl.1} parent=1 // pred_check_branch
      %52 = sbr.rel (0) target = $region37
    $region36: #{_forward_impl.1} parent=1 // pred_region
      %53 = dma.done [#allocation5], 4096
    $region37: #{_forward_impl.1} parent=1 // pred_fallthru
      _
    %v55 = vld [vmem:[%s0] sm:$0xff]
    %v56 = vld [vmem:[%s0 + $0x8] sm:$0xff]
    %v57 = vld [vmem:[%s0 + $0x10] sm:$0xff]
    %v58 = vld [vmem:[%s0 + $0x18] sm:$0xff]
    %v59 = vld [vmem:[%s0 + $0x20] sm:$0xff]
    %v60 = vld [vmem:[%s0 + $0x28] sm:$0xff]
    %v61 = vld [vmem:[%s0 + $0x30] sm:$0xff]
    %v62 = vld [vmem:[%s0 + $0x38] sm:$0xff]
    %v63 = vld [vmem:[%s0 + $0x40] sm:$0xff]
    %v64 = vld [vmem:[%s0 + $0x48] sm:$0xff]
    %v65 = vld [vmem:[%s0 + $0x50] sm:$0xff]
    %v66 = vld [vmem:[%s0 + $0x58] sm:$0xff]
    %v67 = vpack.c.bf16 %v61, %v55
    %v68 = vpack.c.bf16 %v62, %v56
    %v69 = vpack.c.bf16 %v63, %v57
    %v70 = vpack.c.bf16 %v64, %v58
    %v71 = vpack.c.bf16 %v65, %v59
    %v72 = vpack.c.bf16 %v66, %v60
    %v73 = vld [vmem:[#allocation2] sm:$0xff]
    %v74 = vld [vmem:[#allocation2 + $0x8] sm:$0xff]
    %v75 = vld [vmem:[#allocation2 + $0x10] sm:$0xff]
    %v76 = vld [vmem:[#allocation2 + $0x18] sm:$0xff]
    %v77 = vld [vmem:[#allocation2 + $0x20] sm:$0xff]
    %v78 = vld [vmem:[#allocation2 + $0x28] sm:$0xff]
    %v79 = vld [vmem:[#allocation2 + $0x30] sm:$0xff]
    %v80 = vld [vmem:[#allocation2 + $0x38] sm:$0xff]
    %v81 = vld [vmem:[#allocation2 + $0x40] sm:$0xff]
    %v82 = vld [vmem:[#allocation2 + $0x48] sm:$0xff]
    %v83 = vld [vmem:[#allocation2 + $0x50] sm:$0xff]
    %v84 = vld [vmem:[#allocation2 + $0x58] sm:$0xff]
    %v85 = vld [vmem:[#allocation2 + $0x60] sm:$0xff]
    %v86 = vld [vmem:[#allocation2 + $0x68] sm:$0xff]
    %v87 = vld [vmem:[#allocation2 + $0x70] sm:$0xff]
    %v88 = vld [vmem:[#allocation2 + $0x78] sm:$0xff]
    %v89 = vld [vmem:[#allocation2 + $0x80] sm:$0xff]
    %v90 = vld [vmem:[#allocation2 + $0x88] sm:$0xff]
    %v91 = vld [vmem:[#allocation2 + $0x90] sm:$0xff]
    %v92 = vld [vmem:[#allocation2 + $0x98] sm:$0xff]
    %v93 = vld [vmem:[#allocation2 + $0xa0] sm:$0xff]
    %v94 = vld [vmem:[#allocation2 + $0xa8] sm:$0xff]
    %v95 = vld [vmem:[#allocation2 + $0xb0] sm:$0xff]
    %v96 = vld [vmem:[#allocation2 + $0xb8] sm:$0xff]
    %v97 = vld [vmem:[#allocation2 + $0xc0] sm:$0xff]
    %v98 = vld [vmem:[#allocation2 + $0xc8] sm:$0xff]
    %v99 = vld [vmem:[#allocation2 + $0xd0] sm:$0xff]
    %v100 = vld [vmem:[#allocation2 + $0xd8] sm:$0xff]
    %v101 = vld [vmem:[#allocation2 + $0xe0] sm:$0xff]
    %v102 = vld [vmem:[#allocation2 + $0xe8] sm:$0xff]
    %v103 = vld [vmem:[#allocation2 + $0xf0] sm:$0xff]
    %v104 = vld [vmem:[#allocation2 + $0xf8] sm:$0xff]
    %v105 = vld [vmem:[#allocation2 + $0x100] sm:$0xff]
    %v106 = vld [vmem:[#allocation2 + $0x108] sm:$0xff]
    %v107 = vld [vmem:[#allocation2 + $0x110] sm:$0xff]
    %v108 = vld [vmem:[#allocation2 + $0x118] sm:$0xff]
    %v109 = vld [vmem:[#allocation2 + $0x120] sm:$0xff]
    %v110 = vld [vmem:[#allocation2 + $0x128] sm:$0xff]
    %v111 = vld [vmem:[#allocation2 + $0x130] sm:$0xff]
    %v112 = vld [vmem:[#allocation2 + $0x138] sm:$0xff]
    %v113 = vld [vmem:[#allocation2 + $0x140] sm:$0xff]
    %v114 = vld [vmem:[#allocation2 + $0x148] sm:$0xff]
    %v115 = vld [vmem:[#allocation2 + $0x150] sm:$0xff]
    %v116 = vld [vmem:[#allocation2 + $0x158] sm:$0xff]
    %v117 = vld [vmem:[#allocation2 + $0x160] sm:$0xff]
    %v118 = vld [vmem:[#allocation2 + $0x168] sm:$0xff]
    %v119 = vld [vmem:[#allocation2 + $0x170] sm:$0xff]
    %v120 = vld [vmem:[#allocation2 + $0x178] sm:$0xff]
    %v121 = vld [vmem:[#allocation2 + $0x180] sm:$0xff]
    %v122 = vld [vmem:[#allocation2 + $0x188] sm:$0xff]
    %v123 = vld [vmem:[#allocation2 + $0x190] sm:$0xff]
    %v124 = vld [vmem:[#allocation2 + $0x198] sm:$0xff]
    %v125 = vld [vmem:[#allocation2 + $0x1a0] sm:$0xff]
    %v126 = vld [vmem:[#allocation2 + $0x1a8] sm:$0xff]
    %v127 = vld [vmem:[#allocation2 + $0x1b0] sm:$0xff]
    %v128 = vld [vmem:[#allocation2 + $0x1b8] sm:$0xff]
    %v129 = vld [vmem:[#allocation2 + $0x1c0] sm:$0xff]
    %v130 = vld [vmem:[#allocation2 + $0x1c8] sm:$0xff]
    %v131 = vld [vmem:[#allocation2 + $0x1d0] sm:$0xff]
    %v132 = vld [vmem:[#allocation2 + $0x1d8] sm:$0xff]
    %v133 = vld [vmem:[#allocation2 + $0x1e0] sm:$0xff]
    %v134 = vld [vmem:[#allocation2 + $0x1e8] sm:$0xff]
    %v135 = vld [vmem:[#allocation2 + $0x1f0] sm:$0xff]
    %v136 = vld [vmem:[#allocation2 + $0x1f8] sm:$0xff]
    %v137 = vld [vmem:[#allocation2 + $0x200] sm:$0xff]
    %v138 = vld [vmem:[#allocation2 + $0x208] sm:$0xff]
    %v139 = vld [vmem:[#allocation2 + $0x210] sm:$0xff]
    %v140 = vld [vmem:[#allocation2 + $0x218] sm:$0xff]
    %v141 = vld [vmem:[#allocation2 + $0x220] sm:$0xff]
    %v142 = vld [vmem:[#allocation2 + $0x228] sm:$0xff]
    %v143 = vld [vmem:[#allocation2 + $0x230] sm:$0xff]
    %v144 = vld [vmem:[#allocation2 + $0x238] sm:$0xff]
    %v145 = vld [vmem:[#allocation2 + $0x240] sm:$0xff]
    %v146 = vld [vmem:[#allocation2 + $0x248] sm:$0xff]
    %v147 = vld [vmem:[#allocation2 + $0x250] sm:$0xff]
    %v148 = vld [vmem:[#allocation2 + $0x258] sm:$0xff]
    %v149 = vld [vmem:[#allocation2 + $0x260] sm:$0xff]
    %v150 = vld [vmem:[#allocation2 + $0x268] sm:$0xff]
    %v151 = vld [vmem:[#allocation2 + $0x270] sm:$0xff]
    %v152 = vld [vmem:[#allocation2 + $0x278] sm:$0xff]
    %v153 = vld [vmem:[#allocation2 + $0x280] sm:$0xff]
    %v154 = vld [vmem:[#allocation2 + $0x288] sm:$0xff]
    %v155 = vld [vmem:[#allocation2 + $0x290] sm:$0xff]
    %v156 = vld [vmem:[#allocation2 + $0x298] sm:$0xff]
    %v157 = vld [vmem:[#allocation2 + $0x2a0] sm:$0xff]
    %v158 = vld [vmem:[#allocation2 + $0x2a8] sm:$0xff]
    %v159 = vld [vmem:[#allocation2 + $0x2b0] sm:$0xff]
    %v160 = vld [vmem:[#allocation2 + $0x2b8] sm:$0xff]
    %v161 = vld [vmem:[#allocation2 + $0x2c0] sm:$0xff]
    %v162 = vld [vmem:[#allocation2 + $0x2c8] sm:$0xff]
    %v163 = vld [vmem:[#allocation2 + $0x2d0] sm:$0xff]
    %v164 = vld [vmem:[#allocation2 + $0x2d8] sm:$0xff]
    %v165 = vld [vmem:[#allocation2 + $0x2e0] sm:$0xff]
    %v166 = vld [vmem:[#allocation2 + $0x2e8] sm:$0xff]
    %v167 = vld [vmem:[#allocation2 + $0x2f0] sm:$0xff]
    %v168 = vld [vmem:[#allocation2 + $0x2f8] sm:$0xff]
    %v169 = vld [vmem:[%s2] sm:$0x3]
    %v171 = vlaneseq
    %v172 = vshrl.u32 %v171, 7
    %v173 = vsub.s32 0, %v172
    %v174 = vrot.slane %v169, %v173
    %v175 = vlaneseq
    %v176 = vshrl.u32 %v175, 7
    %v177 = vsub.s32 1, %v176
    %v178 = vrot.slane %v169, %v177
    %v277 = vunpack.c.l.b16 %v73
    %v278 = vunpack.c.h.b16 %v73
    %v279 = vunpack.c.l.b16 %v74
    %v280 = vunpack.c.h.b16 %v74
    %v281 = vunpack.c.l.b16 %v75
    %v282 = vunpack.c.h.b16 %v75
    %v283 = vunpack.c.l.b16 %v76
    %v284 = vunpack.c.h.b16 %v76
    %v285 = vunpack.c.l.b16 %v77
    %v286 = vunpack.c.h.b16 %v77
    %v287 = vunpack.c.l.b16 %v78
    %v288 = vunpack.c.h.b16 %v78
    %v289 = vunpack.c.l.b16 %v79
    %v290 = vunpack.c.h.b16 %v79
    %v291 = vunpack.c.l.b16 %v80
    %v292 = vunpack.c.h.b16 %v80
    %v293 = vunpack.c.l.b16 %v81
    %v294 = vunpack.c.h.b16 %v81
    %v295 = vunpack.c.l.b16 %v82
    %v296 = vunpack.c.h.b16 %v82
    %v297 = vunpack.c.l.b16 %v83
    %v298 = vunpack.c.h.b16 %v83
    %v299 = vunpack.c.l.b16 %v84
    %v300 = vunpack.c.h.b16 %v84
    %v301 = vunpack.c.l.b16 %v85
    %v302 = vunpack.c.h.b16 %v85
    %v303 = vunpack.c.l.b16 %v86
    %v304 = vunpack.c.h.b16 %v86
    %v305 = vunpack.c.l.b16 %v87
    %v306 = vunpack.c.h.b16 %v87
    %v307 = vunpack.c.l.b16 %v88
    %v308 = vunpack.c.h.b16 %v88
    %v309 = vunpack.c.l.b16 %v89
    %v310 = vunpack.c.h.b16 %v89
    %v311 = vunpack.c.l.b16 %v90
    %v312 = vunpack.c.h.b16 %v90
    %v313 = vunpack.c.l.b16 %v91
    %v314 = vunpack.c.h.b16 %v91
    %v315 = vunpack.c.l.b16 %v92
    %v316 = vunpack.c.h.b16 %v92
    %v317 = vunpack.c.l.b16 %v93
    %v318 = vunpack.c.h.b16 %v93
    %v319 = vunpack.c.l.b16 %v94
    %v320 = vunpack.c.h.b16 %v94
    %v321 = vunpack.c.l.b16 %v95
    %v322 = vunpack.c.h.b16 %v95
    %v323 = vunpack.c.l.b16 %v96
    %v324 = vunpack.c.h.b16 %v96
    %v325 = vunpack.c.l.b16 %v97
    %v326 = vunpack.c.h.b16 %v97
    %v327 = vunpack.c.l.b16 %v98
    %v328 = vunpack.c.h.b16 %v98
    %v329 = vunpack.c.l.b16 %v99
    %v330 = vunpack.c.h.b16 %v99
    %v331 = vunpack.c.l.b16 %v100
    %v332 = vunpack.c.h.b16 %v100
    %v333 = vunpack.c.l.b16 %v101
    %v334 = vunpack.c.h.b16 %v101
    %v335 = vunpack.c.l.b16 %v102
    %v336 = vunpack.c.h.b16 %v102
    %v337 = vunpack.c.l.b16 %v103
    %v338 = vunpack.c.h.b16 %v103
    %v339 = vunpack.c.l.b16 %v104
    %v340 = vunpack.c.h.b16 %v104
    %v341 = vunpack.c.l.b16 %v105
    %v342 = vunpack.c.h.b16 %v105
    %v343 = vunpack.c.l.b16 %v106
    %v344 = vunpack.c.h.b16 %v106
    %v345 = vunpack.c.l.b16 %v107
    %v346 = vunpack.c.h.b16 %v107
    %v347 = vunpack.c.l.b16 %v108
    %v348 = vunpack.c.h.b16 %v108
    %v349 = vunpack.c.l.b16 %v109
    %v350 = vunpack.c.h.b16 %v109
    %v351 = vunpack.c.l.b16 %v110
    %v352 = vunpack.c.h.b16 %v110
    %v353 = vunpack.c.l.b16 %v111
    %v354 = vunpack.c.h.b16 %v111
    %v355 = vunpack.c.l.b16 %v112
    %v356 = vunpack.c.h.b16 %v112
    %v357 = vunpack.c.l.b16 %v113
    %v358 = vunpack.c.h.b16 %v113
    %v359 = vunpack.c.l.b16 %v114
    %v360 = vunpack.c.h.b16 %v114
    %v361 = vunpack.c.l.b16 %v115
    %v362 = vunpack.c.h.b16 %v115
    %v363 = vunpack.c.l.b16 %v116
    %v364 = vunpack.c.h.b16 %v116
    %v365 = vunpack.c.l.b16 %v117
    %v366 = vunpack.c.h.b16 %v117
    %v367 = vunpack.c.l.b16 %v118
    %v368 = vunpack.c.h.b16 %v118
    %v369 = vunpack.c.l.b16 %v119
    %v370 = vunpack.c.h.b16 %v119
    %v371 = vunpack.c.l.b16 %v120
    %v372 = vunpack.c.h.b16 %v120
    %v373 = vunpack.c.l.b16 %v121
    %v374 = vunpack.c.h.b16 %v121
    %v375 = vunpack.c.l.b16 %v122
    %v376 = vunpack.c.h.b16 %v122
    %v377 = vunpack.c.l.b16 %v123
    %v378 = vunpack.c.h.b16 %v123
    %v379 = vunpack.c.l.b16 %v124
    %v380 = vunpack.c.h.b16 %v124
    %v381 = vunpack.c.l.b16 %v125
    %v382 = vunpack.c.h.b16 %v125
    %v383 = vunpack.c.l.b16 %v126
    %v384 = vunpack.c.h.b16 %v126
    %v385 = vunpack.c.l.b16 %v127
    %v386 = vunpack.c.h.b16 %v127
    %v387 = vunpack.c.l.b16 %v128
    %v388 = vunpack.c.h.b16 %v128
    %v389 = vunpack.c.l.b16 %v129
    %v390 = vunpack.c.h.b16 %v129
    %v391 = vunpack.c.l.b16 %v130
    %v392 = vunpack.c.h.b16 %v130
    %v393 = vunpack.c.l.b16 %v131
    %v394 = vunpack.c.h.b16 %v131
    %v395 = vunpack.c.l.b16 %v132
    %v396 = vunpack.c.h.b16 %v132
    %v397 = vunpack.c.l.b16 %v133
    %v398 = vunpack.c.h.b16 %v133
    %v399 = vunpack.c.l.b16 %v134
    %v400 = vunpack.c.h.b16 %v134
    %v401 = vunpack.c.l.b16 %v135
    %v402 = vunpack.c.h.b16 %v135
    %v403 = vunpack.c.l.b16 %v136
    %v404 = vunpack.c.h.b16 %v136
    %v405 = vunpack.c.l.b16 %v137
    %v406 = vunpack.c.h.b16 %v137
    %v407 = vunpack.c.l.b16 %v138
    %v408 = vunpack.c.h.b16 %v138
    %v409 = vunpack.c.l.b16 %v139
    %v410 = vunpack.c.h.b16 %v139
    %v411 = vunpack.c.l.b16 %v140
    %v412 = vunpack.c.h.b16 %v140
    %v413 = vunpack.c.l.b16 %v141
    %v414 = vunpack.c.h.b16 %v141
    %v415 = vunpack.c.l.b16 %v142
    %v416 = vunpack.c.h.b16 %v142
    %v417 = vunpack.c.l.b16 %v143
    %v418 = vunpack.c.h.b16 %v143
    %v419 = vunpack.c.l.b16 %v144
    %v420 = vunpack.c.h.b16 %v144
    %v421 = vunpack.c.l.b16 %v145
    %v422 = vunpack.c.h.b16 %v145
    %v423 = vunpack.c.l.b16 %v146
    %v424 = vunpack.c.h.b16 %v146
    %v425 = vunpack.c.l.b16 %v147
    %v426 = vunpack.c.h.b16 %v147
    %v427 = vunpack.c.l.b16 %v148
    %v428 = vunpack.c.h.b16 %v148
    %v429 = vunpack.c.l.b16 %v149
    %v430 = vunpack.c.h.b16 %v149
    %v431 = vunpack.c.l.b16 %v150
    %v432 = vunpack.c.h.b16 %v150
    %v433 = vunpack.c.l.b16 %v151
    %v434 = vunpack.c.h.b16 %v151
    %v435 = vunpack.c.l.b16 %v152
    %v436 = vunpack.c.h.b16 %v152
    %v437 = vunpack.c.l.b16 %v153
    %v438 = vunpack.c.h.b16 %v153
    %v439 = vunpack.c.l.b16 %v154
    %v440 = vunpack.c.h.b16 %v154
    %v441 = vunpack.c.l.b16 %v155
    %v442 = vunpack.c.h.b16 %v155
    %v443 = vunpack.c.l.b16 %v156
    %v444 = vunpack.c.h.b16 %v156
    %v445 = vunpack.c.l.b16 %v157
    %v446 = vunpack.c.h.b16 %v157
    %v447 = vunpack.c.l.b16 %v158
    %v448 = vunpack.c.h.b16 %v158
    %v449 = vunpack.c.l.b16 %v159
    %v450 = vunpack.c.h.b16 %v159
    %v451 = vunpack.c.l.b16 %v160
    %v452 = vunpack.c.h.b16 %v160
    %v453 = vunpack.c.l.b16 %v161
    %v454 = vunpack.c.h.b16 %v161
    %v455 = vunpack.c.l.b16 %v162
    %v456 = vunpack.c.h.b16 %v162
    %v457 = vunpack.c.l.b16 %v163
    %v458 = vunpack.c.h.b16 %v163
    %v459 = vunpack.c.l.b16 %v164
    %v460 = vunpack.c.h.b16 %v164
    %v461 = vunpack.c.l.b16 %v165
    %v462 = vunpack.c.h.b16 %v165
    %v463 = vunpack.c.l.b16 %v166
    %v464 = vunpack.c.h.b16 %v166
    %v465 = vunpack.c.l.b16 %v167
    %v466 = vunpack.c.h.b16 %v167
    %v467 = vunpack.c.l.b16 %v168
    %v468 = vunpack.c.h.b16 %v168
    %v469 = vpack.c.b16 %v279, %v277
    %v470 = vpack.c.b16 %v280, %v278
    %v471 = vpack.c.b16 %v283, %v281
    %v472 = vpack.c.b16 %v284, %v282
    %v473 = vpack.c.b16 %v287, %v285
    %v474 = vpack.c.b16 %v288, %v286
    %v475 = vpack.c.b16 %v291, %v289
    %v476 = vpack.c.b16 %v292, %v290
    %v477 = vpack.c.b16 %v295, %v293
    %v478 = vpack.c.b16 %v296, %v294
    %v479 = vpack.c.b16 %v299, %v297
    %v480 = vpack.c.b16 %v300, %v298
    %v481 = vpack.c.b16 %v303, %v301
    %v482 = vpack.c.b16 %v304, %v302
    %v483 = vpack.c.b16 %v307, %v305
    %v484 = vpack.c.b16 %v308, %v306
    %v485 = vpack.c.b16 %v311, %v309
    %v486 = vpack.c.b16 %v312, %v310
    %v487 = vpack.c.b16 %v315, %v313
    %v488 = vpack.c.b16 %v316, %v314
    %v489 = vpack.c.b16 %v319, %v317
    %v490 = vpack.c.b16 %v320, %v318
    %v491 = vpack.c.b16 %v323, %v321
    %v492 = vpack.c.b16 %v324, %v322
    %v493 = vpack.c.b16 %v327, %v325
    %v494 = vpack.c.b16 %v328, %v326
    %v495 = vpack.c.b16 %v331, %v329
    %v496 = vpack.c.b16 %v332, %v330
    %v497 = vpack.c.b16 %v335, %v333
    %v498 = vpack.c.b16 %v336, %v334
    %v499 = vpack.c.b16 %v339, %v337
    %v500 = vpack.c.b16 %v340, %v338
    %v501 = vpack.c.b16 %v343, %v341
    %v502 = vpack.c.b16 %v344, %v342
    %v503 = vpack.c.b16 %v347, %v345
    %v504 = vpack.c.b16 %v348, %v346
    %v505 = vpack.c.b16 %v351, %v349
    %v506 = vpack.c.b16 %v352, %v350
    %v507 = vpack.c.b16 %v355, %v353
    %v508 = vpack.c.b16 %v356, %v354
    %v509 = vpack.c.b16 %v359, %v357
    %v510 = vpack.c.b16 %v360, %v358
    %v511 = vpack.c.b16 %v363, %v361
    %v512 = vpack.c.b16 %v364, %v362
    %v513 = vpack.c.b16 %v367, %v365
    %v514 = vpack.c.b16 %v368, %v366
    %v515 = vpack.c.b16 %v371, %v369
    %v516 = vpack.c.b16 %v372, %v370
    %v517 = vpack.c.b16 %v375, %v373
    %v518 = vpack.c.b16 %v376, %v374
    %v519 = vpack.c.b16 %v379, %v377
    %v520 = vpack.c.b16 %v380, %v378
    %v521 = vpack.c.b16 %v383, %v381
    %v522 = vpack.c.b16 %v384, %v382
    %v523 = vpack.c.b16 %v387, %v385
    %v524 = vpack.c.b16 %v388, %v386
    %v525 = vpack.c.b16 %v391, %v389
    %v526 = vpack.c.b16 %v392, %v390
    %v527 = vpack.c.b16 %v395, %v393
    %v528 = vpack.c.b16 %v396, %v394
    %v529 = vpack.c.b16 %v399, %v397
    %v530 = vpack.c.b16 %v400, %v398
    %v531 = vpack.c.b16 %v403, %v401
    %v532 = vpack.c.b16 %v404, %v402
    %v533 = vpack.c.b16 %v407, %v405
    %v534 = vpack.c.b16 %v408, %v406
    %v535 = vpack.c.b16 %v411, %v409
    %v536 = vpack.c.b16 %v412, %v410
    %v537 = vpack.c.b16 %v415, %v413
    %v538 = vpack.c.b16 %v416, %v414
    %v539 = vpack.c.b16 %v419, %v417
    %v540 = vpack.c.b16 %v420, %v418
    %v541 = vpack.c.b16 %v423, %v421
    %v542 = vpack.c.b16 %v424, %v422
    %v543 = vpack.c.b16 %v427, %v425
    %v544 = vpack.c.b16 %v428, %v426
    %v545 = vpack.c.b16 %v431, %v429
    %v546 = vpack.c.b16 %v432, %v430
    %v547 = vpack.c.b16 %v435, %v433
    %v548 = vpack.c.b16 %v436, %v434
    %v549 = vpack.c.b16 %v439, %v437
    %v550 = vpack.c.b16 %v440, %v438
    %v551 = vpack.c.b16 %v443, %v441
    %v552 = vpack.c.b16 %v444, %v442
    %v553 = vpack.c.b16 %v447, %v445
    %v554 = vpack.c.b16 %v448, %v446
    %v555 = vpack.c.b16 %v451, %v449
    %v556 = vpack.c.b16 %v452, %v450
    %v557 = vpack.c.b16 %v455, %v453
    %v558 = vpack.c.b16 %v456, %v454
    %v559 = vpack.c.b16 %v459, %v457
    %v560 = vpack.c.b16 %v460, %v458
    %v561 = vpack.c.b16 %v463, %v461
    %v562 = vpack.c.b16 %v464, %v462
    %v563 = vpack.c.b16 %v467, %v465
    %v564 = vpack.c.b16 %v468, %v466
    %661 = vmatprep.subr.bf16.mxu0 %v470
    %662 = vmatpush1.bf16.msra.mxu0 %v469
    %663 = vmatprep.subr.bf16.mxu0 %v472
    %664 = vmatpush1.bf16.msra.mxu0 %v471
    %665 = vmatprep.subr.bf16.mxu0 %v474
    %666 = vmatpush1.bf16.msra.mxu0 %v473
    %667 = vmatprep.subr.bf16.mxu0 %v476
    %668 = vmatpush1.bf16.msra.mxu0 %v475
    %669 = vmatprep.subr.bf16.mxu0 %v478
    %670 = vmatpush1.bf16.msra.mxu0 %v477
    %671 = vmatprep.subr.bf16.mxu0 %v480
    %672 = vmatpush1.bf16.msra.mxu0 %v479
    %673 = vmatprep.subr.bf16.mxu0 %v482
    %674 = vmatpush1.bf16.msra.mxu0 %v481
    %675 = vmatprep.subr.bf16.mxu0 %v484
    %676 = vmatpush1.bf16.msra.mxu0 %v483
    %677 = vmatprep.subr.bf16.mxu0 %v486
    %678 = vmatpush1.bf16.msra.mxu0 %v485
    %679 = vmatprep.subr.bf16.mxu0 %v488
    %680 = vmatpush1.bf16.msra.mxu0 %v487
    %681 = vmatprep.subr.bf16.mxu0 %v490
    %682 = vmatpush1.bf16.msra.mxu0 %v489
    %683 = vmatprep.subr.bf16.mxu0 %v492
    %684 = vmatpush1.bf16.msra.mxu0 %v491
    %685 = vmatprep.subr.bf16.mxu0 %v494
    %686 = vmatpush1.bf16.msra.mxu0 %v493
    %687 = vmatprep.subr.bf16.mxu0 %v496
    %688 = vmatpush1.bf16.msra.mxu0 %v495
    %689 = vmatprep.subr.bf16.mxu0 %v498
    %690 = vmatpush1.bf16.msra.mxu0 %v497
    %691 = vmatprep.subr.bf16.mxu0 %v500
    %692 = vmatpush1.bf16.msra.mxu0 %v499
    %693 = vmatprep.mubr.bf16.mxu0 %v68
    %694 = vmatmul.mubr.bf16.gmra.mrb[0].mxu0 %v67
    %v695 = vpop.f32.mrb[0].mxu0
    %v696 = vadd.f32 %v174, %v695
    %v697 = vpop.f32.mrb[0].mxu0
    %v698 = vadd.f32 %v178, %v697
    %v699 = vpop.f32.mrb[0].mxu0
    %v700 = vadd.f32 %v174, %v699
    %v701 = vpop.f32.mrb[0].mxu0
    %v702 = vadd.f32 %v178, %v701
    %703 = vdwg.mxu0
    %704 = vmatprep.subr.bf16.mxu0 %v502
    %705 = vmatpush1.bf16.msra.mxu0 %v501
    %706 = vmatprep.subr.bf16.mxu0 %v504
    %707 = vmatpush1.bf16.msra.mxu0 %v503
    %708 = vmatprep.subr.bf16.mxu0 %v506
    %709 = vmatpush1.bf16.msra.mxu0 %v505
    %710 = vmatprep.subr.bf16.mxu0 %v508
    %711 = vmatpush1.bf16.msra.mxu0 %v507
    %712 = vmatprep.subr.bf16.mxu0 %v510
    %713 = vmatpush1.bf16.msra.mxu0 %v509
    %714 = vmatprep.subr.bf16.mxu0 %v512
    %715 = vmatpush1.bf16.msra.mxu0 %v511
    %716 = vmatprep.subr.bf16.mxu0 %v514
    %717 = vmatpush1.bf16.msra.mxu0 %v513
    %718 = vmatprep.subr.bf16.mxu0 %v516
    %719 = vmatpush1.bf16.msra.mxu0 %v515
    %720 = vmatprep.subr.bf16.mxu0 %v518
    %721 = vmatpush1.bf16.msra.mxu0 %v517
    %722 = vmatprep.subr.bf16.mxu0 %v520
    %723 = vmatpush1.bf16.msra.mxu0 %v519
    %724 = vmatprep.subr.bf16.mxu0 %v522
    %725 = vmatpush1.bf16.msra.mxu0 %v521
    %726 = vmatprep.subr.bf16.mxu0 %v524
    %727 = vmatpush1.bf16.msra.mxu0 %v523
    %728 = vmatprep.subr.bf16.mxu0 %v526
    %729 = vmatpush1.bf16.msra.mxu0 %v525
    %730 = vmatprep.subr.bf16.mxu0 %v528
    %731 = vmatpush1.bf16.msra.mxu0 %v527
    %732 = vmatprep.subr.bf16.mxu0 %v530
    %733 = vmatpush1.bf16.msra.mxu0 %v529
    %734 = vmatprep.subr.bf16.mxu0 %v532
    %735 = vmatpush1.bf16.msra.mxu0 %v531
    %736 = vmatprep.mubr.bf16.mxu0 %v70
    %737 = vmatmul.mubr.bf16.gmra.mrb[0].mxu0 %v69
    %v738 = vpop.f32.mrb[0].mxu0
    %v739 = vadd.f32 %v696, %v738
    %v740 = vpop.f32.mrb[0].mxu0
    %v741 = vadd.f32 %v698, %v740
    %v742 = vpop.f32.mrb[0].mxu0
    %v743 = vadd.f32 %v700, %v742
    %v744 = vpop.f32.mrb[0].mxu0
    %v745 = vadd.f32 %v702, %v744
    %746 = vdwg.mxu0
    %747 = vmatprep.subr.bf16.mxu0 %v534
    %748 = vmatpush1.bf16.msra.mxu0 %v533
    %749 = vmatprep.subr.bf16.mxu0 %v536
    %750 = vmatpush1.bf16.msra.mxu0 %v535
    %751 = vmatprep.subr.bf16.mxu0 %v538
    %752 = vmatpush1.bf16.msra.mxu0 %v537
    %753 = vmatprep.subr.bf16.mxu0 %v540
    %754 = vmatpush1.bf16.msra.mxu0 %v539
    %755 = vmatprep.subr.bf16.mxu0 %v542
    %756 = vmatpush1.bf16.msra.mxu0 %v541
    %757 = vmatprep.subr.bf16.mxu0 %v544
    %758 = vmatpush1.bf16.msra.mxu0 %v543
    %759 = vmatprep.subr.bf16.mxu0 %v546
    %760 = vmatpush1.bf16.msra.mxu0 %v545
    %761 = vmatprep.subr.bf16.mxu0 %v548
    %762 = vmatpush1.bf16.msra.mxu0 %v547
    %763 = vmatprep.subr.bf16.mxu0 %v550
    %764 = vmatpush1.bf16.msra.mxu0 %v549
    %765 = vmatprep.subr.bf16.mxu0 %v552
    %766 = vmatpush1.bf16.msra.mxu0 %v551
    %767 = vmatprep.subr.bf16.mxu0 %v554
    %768 = vmatpush1.bf16.msra.mxu0 %v553
    %769 = vmatprep.subr.bf16.mxu0 %v556
    %770 = vmatpush1.bf16.msra.mxu0 %v555
    %771 = vmatprep.subr.bf16.mxu0 %v558
    %772 = vmatpush1.bf16.msra.mxu0 %v557
    %773 = vmatprep.subr.bf16.mxu0 %v560
    %774 = vmatpush1.bf16.msra.mxu0 %v559
    %775 = vmatprep.subr.bf16.mxu0 %v562
    %776 = vmatpush1.bf16.msra.mxu0 %v561
    %777 = vmatprep.subr.bf16.mxu0 %v564
    %778 = vmatpush1.bf16.msra.mxu0 %v563
    %779 = vmatprep.mubr.bf16.mxu0 %v72
    %780 = vmatmul.mubr.bf16.gmra.mrb[0].mxu0 %v71
    %v781 = vpop.f32.mrb[0].mxu0
    %v782 = vadd.f32 %v739, %v781
    %v783 = vpop.f32.mrb[0].mxu0
    %v784 = vadd.f32 %v741, %v783
    %v785 = vpop.f32.mrb[0].mxu0
    %v786 = vadd.f32 %v743, %v785
    %v787 = vpop.f32.mrb[0].mxu0
    %v788 = vadd.f32 %v745, %v787
    %789 = vdwg.mxu0
    %v790 = vmax.f32 %v782, 0.0
    %v791 = vmax.f32 %v784, 0.0
    %v792 = vmax.f32 %v786, 0.0
    %v793 = vmax.f32 %v788, 0.0
    %v794 = vpack.c.bf16 %v792, %v790
    %v795 = vpack.c.bf16 %v793, %v791
    %v796 = vld [vmem:[#allocation4] sm:$0xff]
    %v797 = vld [vmem:[#allocation4 + $0x8] sm:$0xff]
    %v798 = vld [vmem:[#allocation4 + $0x10] sm:$0xff]
    %v799 = vld [vmem:[#allocation4 + $0x18] sm:$0xff]
    %v800 = vld [vmem:[#allocation4 + $0x20] sm:$0xff]
    %v801 = vld [vmem:[#allocation4 + $0x28] sm:$0xff]
    %v802 = vld [vmem:[#allocation4 + $0x30] sm:$0xff]
    %v803 = vld [vmem:[#allocation4 + $0x38] sm:$0xff]
    %v804 = vld [vmem:[#allocation4 + $0x40] sm:$0xff]
    %v805 = vld [vmem:[#allocation4 + $0x48] sm:$0xff]
    %v806 = vld [vmem:[#allocation4 + $0x50] sm:$0xff]
    %v807 = vld [vmem:[#allocation4 + $0x58] sm:$0xff]
    %v808 = vld [vmem:[#allocation4 + $0x60] sm:$0xff]
    %v809 = vld [vmem:[#allocation4 + $0x68] sm:$0xff]
    %v810 = vld [vmem:[#allocation4 + $0x70] sm:$0xff]
    %v811 = vld [vmem:[#allocation4 + $0x78] sm:$0xff]
    %v812 = vld [vmem:[#allocation4 + $0x80] sm:$0xff]
    %v813 = vld [vmem:[#allocation4 + $0x88] sm:$0xff]
    %v814 = vld [vmem:[#allocation4 + $0x90] sm:$0xff]
    %v815 = vld [vmem:[#allocation4 + $0x98] sm:$0xff]
    %v816 = vld [vmem:[#allocation4 + $0xa0] sm:$0xff]
    %v817 = vld [vmem:[#allocation4 + $0xa8] sm:$0xff]
    %v818 = vld [vmem:[#allocation4 + $0xb0] sm:$0xff]
    %v819 = vld [vmem:[#allocation4 + $0xb8] sm:$0xff]
    %v820 = vld [vmem:[#allocation4 + $0xc0] sm:$0xff]
    %v821 = vld [vmem:[#allocation4 + $0xc8] sm:$0xff]
    %v822 = vld [vmem:[#allocation4 + $0xd0] sm:$0xff]
    %v823 = vld [vmem:[#allocation4 + $0xd8] sm:$0xff]
    %v824 = vld [vmem:[#allocation4 + $0xe0] sm:$0xff]
    %v825 = vld [vmem:[#allocation4 + $0xe8] sm:$0xff]
    %v826 = vld [vmem:[#allocation4 + $0xf0] sm:$0xff]
    %v827 = vld [vmem:[#allocation4 + $0xf8] sm:$0xff]
    %v828 = vld [vmem:[%s4] sm:$0x3]
    %v830 = vlaneseq
    %v831 = vshrl.u32 %v830, 7
    %v832 = vsub.s32 0, %v831
    %v833 = vrot.slane %v828, %v832
    %v834 = vlaneseq
    %v835 = vshrl.u32 %v834, 7
    %v836 = vsub.s32 1, %v835
    %v837 = vrot.slane %v828, %v836
    %v872 = vunpack.c.l.b16 %v796
    %v873 = vunpack.c.h.b16 %v796
    %v874 = vunpack.c.l.b16 %v797
    %v875 = vunpack.c.h.b16 %v797
    %v876 = vunpack.c.l.b16 %v798
    %v877 = vunpack.c.h.b16 %v798
    %v878 = vunpack.c.l.b16 %v799
    %v879 = vunpack.c.h.b16 %v799
    %v880 = vunpack.c.l.b16 %v800
    %v881 = vunpack.c.h.b16 %v800
    %v882 = vunpack.c.l.b16 %v801
    %v883 = vunpack.c.h.b16 %v801
    %v884 = vunpack.c.l.b16 %v802
    %v885 = vunpack.c.h.b16 %v802
    %v886 = vunpack.c.l.b16 %v803
    %v887 = vunpack.c.h.b16 %v803
    %v888 = vunpack.c.l.b16 %v804
    %v889 = vunpack.c.h.b16 %v804
    %v890 = vunpack.c.l.b16 %v805
    %v891 = vunpack.c.h.b16 %v805
    %v892 = vunpack.c.l.b16 %v806
    %v893 = vunpack.c.h.b16 %v806
    %v894 = vunpack.c.l.b16 %v807
    %v895 = vunpack.c.h.b16 %v807
    %v896 = vunpack.c.l.b16 %v808
    %v897 = vunpack.c.h.b16 %v808
    %v898 = vunpack.c.l.b16 %v809
    %v899 = vunpack.c.h.b16 %v809
    %v900 = vunpack.c.l.b16 %v810
    %v901 = vunpack.c.h.b16 %v810
    %v902 = vunpack.c.l.b16 %v811
    %v903 = vunpack.c.h.b16 %v811
    %v904 = vunpack.c.l.b16 %v812
    %v905 = vunpack.c.h.b16 %v812
    %v906 = vunpack.c.l.b16 %v813
    %v907 = vunpack.c.h.b16 %v813
    %v908 = vunpack.c.l.b16 %v814
    %v909 = vunpack.c.h.b16 %v814
    %v910 = vunpack.c.l.b16 %v815
    %v911 = vunpack.c.h.b16 %v815
    %v912 = vunpack.c.l.b16 %v816
    %v913 = vunpack.c.h.b16 %v816
    %v914 = vunpack.c.l.b16 %v817
    %v915 = vunpack.c.h.b16 %v817
    %v916 = vunpack.c.l.b16 %v818
    %v917 = vunpack.c.h.b16 %v818
    %v918 = vunpack.c.l.b16 %v819
    %v919 = vunpack.c.h.b16 %v819
    %v920 = vunpack.c.l.b16 %v820
    %v921 = vunpack.c.h.b16 %v820
    %v922 = vunpack.c.l.b16 %v821
    %v923 = vunpack.c.h.b16 %v821
    %v924 = vunpack.c.l.b16 %v822
    %v925 = vunpack.c.h.b16 %v822
    %v926 = vunpack.c.l.b16 %v823
    %v927 = vunpack.c.h.b16 %v823
    %v928 = vunpack.c.l.b16 %v824
    %v929 = vunpack.c.h.b16 %v824
    %v930 = vunpack.c.l.b16 %v825
    %v931 = vunpack.c.h.b16 %v825
    %v932 = vunpack.c.l.b16 %v826
    %v933 = vunpack.c.h.b16 %v826
    %v934 = vunpack.c.l.b16 %v827
    %v935 = vunpack.c.h.b16 %v827
    %v936 = vpack.c.b16 %v874, %v872
    %v937 = vpack.c.b16 %v875, %v873
    %v938 = vpack.c.b16 %v878, %v876
    %v939 = vpack.c.b16 %v879, %v877
    %v940 = vpack.c.b16 %v882, %v880
    %v941 = vpack.c.b16 %v883, %v881
    %v942 = vpack.c.b16 %v886, %v884
    %v943 = vpack.c.b16 %v887, %v885
    %v944 = vpack.c.b16 %v890, %v888
    %v945 = vpack.c.b16 %v891, %v889
    %v946 = vpack.c.b16 %v894, %v892
    %v947 = vpack.c.b16 %v895, %v893
    %v948 = vpack.c.b16 %v898, %v896
    %v949 = vpack.c.b16 %v899, %v897
    %v950 = vpack.c.b16 %v902, %v900
    %v951 = vpack.c.b16 %v903, %v901
    %v952 = vpack.c.b16 %v906, %v904
    %v953 = vpack.c.b16 %v907, %v905
    %v954 = vpack.c.b16 %v910, %v908
    %v955 = vpack.c.b16 %v911, %v909
    %v956 = vpack.c.b16 %v914, %v912
    %v957 = vpack.c.b16 %v915, %v913
    %v958 = vpack.c.b16 %v918, %v916
    %v959 = vpack.c.b16 %v919, %v917
    %v960 = vpack.c.b16 %v922, %v920
    %v961 = vpack.c.b16 %v923, %v921
    %v962 = vpack.c.b16 %v926, %v924
    %v963 = vpack.c.b16 %v927, %v925
    %v964 = vpack.c.b16 %v930, %v928
    %v965 = vpack.c.b16 %v931, %v929
    %v966 = vpack.c.b16 %v934, %v932
    %v967 = vpack.c.b16 %v935, %v933
    %1000 = vmatprep.subr.bf16.mxu0 %v937
    %1001 = vmatpush1.bf16.msra.mxu0 %v936
    %1002 = vmatprep.subr.bf16.mxu0 %v939
    %1003 = vmatpush1.bf16.msra.mxu0 %v938
    %1004 = vmatprep.subr.bf16.mxu0 %v941
    %1005 = vmatpush1.bf16.msra.mxu0 %v940
    %1006 = vmatprep.subr.bf16.mxu0 %v943
    %1007 = vmatpush1.bf16.msra.mxu0 %v942
    %1008 = vmatprep.subr.bf16.mxu0 %v945
    %1009 = vmatpush1.bf16.msra.mxu0 %v944
    %1010 = vmatprep.subr.bf16.mxu0 %v947
    %1011 = vmatpush1.bf16.msra.mxu0 %v946
    %1012 = vmatprep.subr.bf16.mxu0 %v949
    %1013 = vmatpush1.bf16.msra.mxu0 %v948
    %1014 = vmatprep.subr.bf16.mxu0 %v951
    %1015 = vmatpush1.bf16.msra.mxu0 %v950
    %1016 = vmatprep.subr.bf16.mxu0 %v953
    %1017 = vmatpush1.bf16.msra.mxu0 %v952
    %1018 = vmatprep.subr.bf16.mxu0 %v955
    %1019 = vmatpush1.bf16.msra.mxu0 %v954
    %1020 = vmatprep.subr.bf16.mxu0 %v957
    %1021 = vmatpush1.bf16.msra.mxu0 %v956
    %1022 = vmatprep.subr.bf16.mxu0 %v959
    %1023 = vmatpush1.bf16.msra.mxu0 %v958
    %1024 = vmatprep.subr.bf16.mxu0 %v961
    %1025 = vmatpush1.bf16.msra.mxu0 %v960
    %1026 = vmatprep.subr.bf16.mxu0 %v963
    %1027 = vmatpush1.bf16.msra.mxu0 %v962
    %1028 = vmatprep.subr.bf16.mxu0 %v965
    %1029 = vmatpush1.bf16.msra.mxu0 %v964
    %1030 = vmatprep.subr.bf16.mxu0 %v967
    %1031 = vmatpush1.bf16.msra.mxu0 %v966
    %1032 = vmatprep.mubr.bf16.mxu0 %v795
    %1033 = vmatmul.mubr.bf16.gmra.mrb[0].mxu0 %v794
    %v1034 = vpop.f32.mrb[0].mxu0
    %v1035 = vadd.f32 %v833, %v1034
    %v1036 = vpop.f32.mrb[0].mxu0
    %v1037 = vadd.f32 %v837, %v1036
    %v1038 = vpop.f32.mrb[0].mxu0
    %v1039 = vadd.f32 %v833, %v1038
    %v1040 = vpop.f32.mrb[0].mxu0
    %v1041 = vadd.f32 %v837, %v1040
    %1042 = vdwg.mxu0
    %v1043 = vmax.f32 %v1035, 0.0
    %v1044 = vmax.f32 %v1037, 0.0
    %v1045 = vmax.f32 %v1039, 0.0
    %v1046 = vmax.f32 %v1041, 0.0
    %v1047 = vpack.c.bf16 %v1045, %v1043
    %v1048 = vpack.c.bf16 %v1046, %v1044
    %v1049 = vld [vmem:[%s5] sm:$0xf]
    %v1050 = vld [vmem:[%s5 + $0x4] sm:$0xf]
    %v1051 = vld [vmem:[%s5 + $0x8] sm:$0xf]
    %v1052 = vld [vmem:[%s5 + $0xc] sm:$0xf]
    %v1053 = vld [vmem:[%s5 + $0x10] sm:$0xf]
    %v1054 = vld [vmem:[%s5 + $0x14] sm:$0xf]
    %v1055 = vld [vmem:[%s5 + $0x18] sm:$0xf]
    %v1056 = vld [vmem:[%s5 + $0x1c] sm:$0xf]
    %v1057 = vld [vmem:[%s5 + $0x20] sm:$0xf]
    %v1058 = vld [vmem:[%s5 + $0x24] sm:$0xf]
    %v1059 = vld [vmem:[%s5 + $0x28] sm:$0xf]
    %v1060 = vld [vmem:[%s5 + $0x2c] sm:$0xf]
    %v1061 = vld [vmem:[%s5 + $0x30] sm:$0xf]
    %v1062 = vld [vmem:[%s5 + $0x34] sm:$0xf]
    %v1063 = vld [vmem:[%s5 + $0x38] sm:$0xf]
    %v1064 = vld [vmem:[%s5 + $0x3c] sm:$0xf]
    %v1065 = vld [vmem:[%s5 + $0x40] sm:$0xf]
    %v1066 = vld [vmem:[%s5 + $0x44] sm:$0xf]
    %v1067 = vld [vmem:[%s5 + $0x48] sm:$0xf]
    %v1068 = vld [vmem:[%s5 + $0x4c] sm:$0xf]
    %v1069 = vld [vmem:[%s5 + $0x50] sm:$0xf]
    %v1070 = vld [vmem:[%s5 + $0x54] sm:$0xf]
    %v1071 = vld [vmem:[%s5 + $0x58] sm:$0xf]
    %v1072 = vld [vmem:[%s5 + $0x5c] sm:$0xf]
    %v1073 = vld [vmem:[%s5 + $0x60] sm:$0xf]
    %v1074 = vld [vmem:[%s5 + $0x64] sm:$0xf]
    %v1075 = vld [vmem:[%s5 + $0x68] sm:$0xf]
    %v1076 = vld [vmem:[%s5 + $0x6c] sm:$0xf]
    %v1077 = vld [vmem:[%s5 + $0x70] sm:$0xf]
    %v1078 = vld [vmem:[%s5 + $0x74] sm:$0xf]
    %v1079 = vld [vmem:[%s5 + $0x78] sm:$0xf]
    %v1080 = vld [vmem:[%s5 + $0x7c] sm:$0xf]
    %v1081 = vld [vmem:[%s6] sm:$0x1]
    %v1083 = vlaneseq
    %v1084 = vshrl.u32 %v1083, 7
    %v1085 = vsub.s32 0, %v1084
    %v1086 = vrot.slane %v1081, %v1085
    %v1120 = vunpack.c.l.b16 %v1049
    %v1121 = vunpack.c.l.b16 %v1050
    %v1122 = vunpack.c.l.b16 %v1051
    %v1123 = vunpack.c.l.b16 %v1052
    %v1124 = vunpack.c.l.b16 %v1053
    %v1125 = vunpack.c.l.b16 %v1054
    %v1126 = vunpack.c.l.b16 %v1055
    %v1127 = vunpack.c.l.b16 %v1056
    %v1128 = vunpack.c.l.b16 %v1057
    %v1129 = vunpack.c.l.b16 %v1058
    %v1130 = vunpack.c.l.b16 %v1059
    %v1131 = vunpack.c.l.b16 %v1060
    %v1132 = vunpack.c.l.b16 %v1061
    %v1133 = vunpack.c.l.b16 %v1062
    %v1134 = vunpack.c.l.b16 %v1063
    %v1135 = vunpack.c.l.b16 %v1064
    %v1136 = vunpack.c.l.b16 %v1065
    %v1137 = vunpack.c.l.b16 %v1066
    %v1138 = vunpack.c.l.b16 %v1067
    %v1139 = vunpack.c.l.b16 %v1068
    %v1140 = vunpack.c.l.b16 %v1069
    %v1141 = vunpack.c.l.b16 %v1070
    %v1142 = vunpack.c.l.b16 %v1071
    %v1143 = vunpack.c.l.b16 %v1072
    %v1144 = vunpack.c.l.b16 %v1073
    %v1145 = vunpack.c.l.b16 %v1074
    %v1146 = vunpack.c.l.b16 %v1075
    %v1147 = vunpack.c.l.b16 %v1076
    %v1148 = vunpack.c.l.b16 %v1077
    %v1149 = vunpack.c.l.b16 %v1078
    %v1150 = vunpack.c.l.b16 %v1079
    %v1151 = vunpack.c.l.b16 %v1080
    %v1152 = vpack.c.b16 %v1121, %v1120
    %v1153 = vpack.c.b16 %v1123, %v1122
    %v1154 = vpack.c.b16 %v1125, %v1124
    %v1155 = vpack.c.b16 %v1127, %v1126
    %v1156 = vpack.c.b16 %v1129, %v1128
    %v1157 = vpack.c.b16 %v1131, %v1130
    %v1158 = vpack.c.b16 %v1133, %v1132
    %v1159 = vpack.c.b16 %v1135, %v1134
    %v1160 = vpack.c.b16 %v1137, %v1136
    %v1161 = vpack.c.b16 %v1139, %v1138
    %v1162 = vpack.c.b16 %v1141, %v1140
    %v1163 = vpack.c.b16 %v1143, %v1142
    %v1164 = vpack.c.b16 %v1145, %v1144
    %v1165 = vpack.c.b16 %v1147, %v1146
    %v1166 = vpack.c.b16 %v1149, %v1148
    %v1167 = vpack.c.b16 %v1151, %v1150
    %1184 = vmatprep.subr.bf16.mxu0 0
    %1185 = vmatpush1.bf16.msra.mxu0 %v1152
    %1186 = vmatprep.subr.bf16.mxu0 0
    %1187 = vmatpush1.bf16.msra.mxu0 %v1153
    %1188 = vmatprep.subr.bf16.mxu0 0
    %1189 = vmatpush1.bf16.msra.mxu0 %v1154
    %1190 = vmatprep.subr.bf16.mxu0 0
    %1191 = vmatpush1.bf16.msra.mxu0 %v1155
    %1192 = vmatprep.subr.bf16.mxu0 0
    %1193 = vmatpush1.bf16.msra.mxu0 %v1156
    %1194 = vmatprep.subr.bf16.mxu0 0
    %1195 = vmatpush1.bf16.msra.mxu0 %v1157
    %1196 = vmatprep.subr.bf16.mxu0 0
    %1197 = vmatpush1.bf16.msra.mxu0 %v1158
    %1198 = vmatprep.subr.bf16.mxu0 0
    %1199 = vmatpush1.bf16.msra.mxu0 %v1159
    %1200 = vmatprep.subr.bf16.mxu0 0
    %1201 = vmatpush1.bf16.msra.mxu0 %v1160
    %1202 = vmatprep.subr.bf16.mxu0 0
    %1203 = vmatpush1.bf16.msra.mxu0 %v1161
    %1204 = vmatprep.subr.bf16.mxu0 0
    %1205 = vmatpush1.bf16.msra.mxu0 %v1162
    %1206 = vmatprep.subr.bf16.mxu0 0
    %1207 = vmatpush1.bf16.msra.mxu0 %v1163
    %1208 = vmatprep.subr.bf16.mxu0 0
    %1209 = vmatpush1.bf16.msra.mxu0 %v1164
    %1210 = vmatprep.subr.bf16.mxu0 0
    %1211 = vmatpush1.bf16.msra.mxu0 %v1165
    %1212 = vmatprep.subr.bf16.mxu0 0
    %1213 = vmatpush1.bf16.msra.mxu0 %v1166
    %1214 = vmatprep.subr.bf16.mxu0 0
    %1215 = vmatpush1.bf16.msra.mxu0 %v1167
    %1216 = vmatprep.mubr.bf16.mxu0 %v1048
    %1217 = vmatmul.mubr.bf16.gmra.mrb[0].mxu0 %v1047
    %v1218 = vpop.f32.mrb[0].mxu0
    %v1219 = vadd.f32 %v1086, %v1218
    %v1220 = vpop.f32.mrb[0].mxu0
    %v1221 = vpop.f32.mrb[0].mxu0
    %v1222 = vadd.f32 %v1086, %v1221
    %v1223 = vpop.f32.mrb[0].mxu0
    %1224 = vdwg.mxu0
    %1225 = vst [vmem:[%s7] sm:$0xff] %v1219
    %1226 = vst [vmem:[%s7 + $0x8] sm:$0xff] %v1222
    // Predicated region
    $region38: #{_forward_impl.1} parent=1 // pred_check
      _
    $region39: #{_forward_impl.1} parent=1 // pred_check_branch
      %1228 = sbr.rel (0) target = $region41
    $region40: #{_forward_impl.1} parent=1 // pred_region
      _
    $region41: #{_forward_impl.1} parent=1 // pred_fallthru
      _
    // Predicated region
    $region42: #{_forward_impl.1} parent=1 // pred_check
      _
    $region43: #{_forward_impl.1} parent=1 // pred_check_branch
      %1230 = sbr.rel (0) target = $region45
    $region44: #{_forward_impl.1} parent=1 // pred_region
      _
    $region45: #{_forward_impl.1} parent=1 // pred_fallthru
      _
    %1231 = vsyncpa [#allocation3], 1
    %1232 = vsyncpa [#allocation5], 1

</llo_original>
